<compile_context>
chip_gen: v6e
topology: v6e:2x2x1
jax: 0.10.0
libtpu: 0.0.40
codegen_flags: <defaults>
</compile_context>

<pallas_src>
import functools
import math

import numpy as np
import jax
import jax.numpy as jnp
from jax import lax
from jax.experimental import pallas as pl
from jax.experimental.pallas import tpu as pltpu


def energy_kernel(x_ref, gx_ref, gy_ref, np_ref, op_ref, scal_ref, o_ref,
                  *, B, C, N):
    """Full EnergyModel forward (square_root nonlinearity).

    x_ref:    (C*B, HW) f32 VMEM  channel-major image slab (row = c*B + b)
    gx_ref:   (1, HW)   f32 VMEM  base meshgrid_x (flattened)
    gy_ref:   (1, HW)   f32 VMEM  base meshgrid_y (flattened)
    np_ref:   (N, 4)    f32 VMEM  packed per-neuron [cos_o, sin_o, px_rot, py_rot]
    op_ref:   (2, N)    f32 VMEM  packed [final_scale; final_bias]
    scal_ref: (4,)      f32 SMEM  [-0.5/(sx^2+eps), -0.5/(sy^2+eps), 2*pi*f, filter_scale]
    o_ref:    (B, N)    f32 VMEM
    """
    a_x = scal_ref[0]          # -0.5 / (sigma_x^2 + 5e-6)
    a_y = scal_ref[1]          # -0.5 / (sigma_y^2 + 5e-6)
    two_pi_f = scal_ref[2]
    filter_scale = scal_ref[3]

    # Channel sum over contiguous B-row chunks of the 2-D slab (no padded
    # (B, C, HW) block, no cross-sublane reduce).
    xs = x_ref[0:B, :]
    for c in range(1, C):
        xs = xs + x_ref[c * B:(c + 1) * B, :]          # (B, HW)

    gx = gx_ref[...]                                   # (1, HW)
    gy = gy_ref[...]                                   # (1, HW)
    p = np_ref[...]                                    # (N, 4)
    cos_o = p[:, 0:1]                                  # (N, 1)
    sin_o = p[:, 1:2]
    px_rot = p[:, 2:3]
    py_rot = p[:, 3:4]

    # Rotated meshgrids per neuron.
    mx_rot = gx * cos_o - gy * sin_o                   # (N, HW)
    my_rot = gx * sin_o + gy * cos_o                   # (N, HW)

    # Gaussian envelope: divides replaced by precomputed scalar multipliers.
    dx = mx_rot - px_rot
    dy = my_rot - py_rot
    gauss = jnp.exp(dx * dx * a_x + dy * dy * a_y)     # (N, HW)

    # Even / odd carriers. cos(phase + pi/2) == -sin(phase); the sign cancels
    # after squaring, so use sin directly (saves an (N,HW) add).
    phase = two_pi_f * (mx_rot + px_rot)
    f_even = gauss * jnp.cos(phase)                    # (N, HW)
    f_odd = gauss * jnp.sin(phase)                     # (N, HW)

    # Single fused MXU contraction: (B, HW) x (2N, HW)^T -> (B, 2N).
    fbank = jnp.concatenate([f_even, f_odd], axis=0)   # (2N, HW)
    dn = (((1,), (1,)), ((), ()))
    proj = lax.dot_general(xs, fbank, dn, preferred_element_type=jnp.float32)

    # Fold filter_scale into the (tiny) projection, before squaring -> exact
    # semantics of the reference even for negative filter_scale.
    proj = proj * filter_scale                         # (B, 2N)

    even = proj[:, 0:N]
    odd = proj[:, N:2 * N]
    energy = even * even + odd * odd                   # (B, N)
    y = jnp.sqrt(energy)                               # 'square_root' nonlinearity

    fscale = op_ref[0:1, :]                            # (1, N)
    fbias = op_ref[1:2, :]                             # (1, N)
    o_ref[...] = fscale * y + fbias


def init_params(key, num_neurons, resolution=(16, 16),
                xlim=(-2.67, 2.67), ylim=(-2.67, 2.67),
                sigma_x_init=0.2, sigma_y_init=0.2, f_init=1.0,
                filter_scale_init=1.0, final_scale_init=1.0):
    """Deterministic synthetic parameters mirroring EnergyModel.__init__."""
    k1, k2, k3 = jax.random.split(key, 3)
    xs = jnp.linspace(xlim[0], xlim[1], resolution[0])
    ys = jnp.linspace(ylim[0], ylim[1], resolution[1])
    mg_x, mg_y = jnp.meshgrid(xs, ys, indexing="ij")  # torch.meshgrid default 'ij'
    return dict(
        positions_x=jax.random.uniform(k1, (num_neurons,), jnp.float32, -1.0, 1.0),
        positions_y=jax.random.uniform(k2, (num_neurons,), jnp.float32, -1.0, 1.0),
        orientations=jax.random.uniform(k3, (num_neurons,), jnp.float32, 0.0, math.pi),
        sigma_x=jnp.float32(sigma_x_init),
        sigma_y=jnp.float32(sigma_y_init),
        f=jnp.float32(f_init),
        filter_scale=jnp.float32(filter_scale_init),
        filter_bias=jnp.float32(0.0),  # unused for the square_root path
        final_scale=jnp.ones((1, num_neurons), jnp.float32) * final_scale_init,
        final_bias=jnp.ones((1, num_neurons), jnp.float32),
        meshgrid_x=mg_x.astype(jnp.float32),
        meshgrid_y=mg_y.astype(jnp.float32),
    )


def energy_model_forward(x, params):
    """x: (B, C, H, W) NCHW, matching the PyTorch module. Returns (B, N)."""
    B, C, H, W = x.shape
    N = params["positions_x"].shape[0]
    HW = H * W

    # Channel-major 2-D image slab: row index = c*B + b (zero sublane padding).
    x2d = jnp.transpose(x.astype(jnp.float32), (1, 0, 2, 3)).reshape(C * B, HW)

    gx = params["meshgrid_x"].reshape(1, HW)
    gy = params["meshgrid_y"].reshape(1, HW)

    # Hoist O(N) per-neuron scalar math out of the kernel and pack it.
    ori = params["orientations"]
    px = params["positions_x"]
    py = params["positions_y"]
    cos_o = jnp.cos(ori)
    sin_o = jnp.sin(ori)
    px_rot = cos_o * px - sin_o * py
    py_rot = sin_o * px + cos_o * py
    nparams = jnp.stack([cos_o, sin_o, px_rot, py_rot], axis=1).astype(jnp.float32)  # (N, 4)

    outparams = jnp.concatenate(
        [params["final_scale"].reshape(1, N), params["final_bias"].reshape(1, N)],
        axis=0).astype(jnp.float32)                                                  # (2, N)

    # Precompute scalar multipliers (kills per-element divides in-kernel).
    sx = params["sigma_x"]
    sy = params["sigma_y"]
    a_x = -0.5 / (sx * sx + 5e-6)
    a_y = -0.5 / (sy * sy + 5e-6)
    two_pi_f = jnp.float32(2.0 * math.pi) * params["f"]
    scalars = jnp.stack([a_x, a_y, two_pi_f,
                         params["filter_scale"]]).astype(jnp.float32)                # (4,)

    vmem = pl.BlockSpec(memory_space=pltpu.MemorySpace.VMEM)
    smem = pl.BlockSpec(memory_space=pltpu.MemorySpace.SMEM)

    # Problem is tiny (HW=256, N=8, B=2): one grid point, full-array VMEM blocks.
    # TODO(synk): for realistic batch sizes, grid over B (tile a multiple of 8,
    #             'parallel' semantics) and cache the (2N,HW) filter bank.
    return pl.pallas_call(
        functools.partial(energy_kernel, B=B, C=C, N=N),
        out_shape=jax.ShapeDtypeStruct((B, N), jnp.float32),
        in_specs=[vmem, vmem, vmem, vmem, vmem, smem],
        out_specs=vmem,
    )(x2d, gx, gy, nparams, outparams, scalars)


def reference_forward(x, p):
    """Pure-JAX transcription of EnergyModel.forward (square_root path)."""
    N = p["positions_x"].shape[0]
    ori = p["orientations"][:, None, None]
    mgx = jnp.broadcast_to(p["meshgrid_x"][None], (N,) + p["meshgrid_x"].shape)
    mgy = jnp.broadcast_to(p["meshgrid_y"][None], (N,) + p["meshgrid_y"].shape)
    mxr = mgx * jnp.cos(ori) - mgy * jnp.sin(ori)
    myr = mgx * jnp.sin(ori) + mgy * jnp.cos(ori)
    pxr = jnp.cos(p["orientations"]) * p["positions_x"] - jnp.sin(p["orientations"]) * p["positions_y"]
    pyr = jnp.sin(p["orientations"]) * p["positions_x"] + jnp.cos(p["orientations"]) * p["positions_y"]
    gauss = jnp.exp(-0.5 * (jnp.square(mxr - pxr[:, None, None]) / (jnp.square(p["sigma_x"]) + 5e-6)
                            + jnp.square(myr - pyr[:, None, None]) / (jnp.square(p["sigma_y"]) + 5e-6)))
    ce = jnp.cos(2 * np.pi * p["f"] * (mxr + pxr[:, None, None]))
    co = jnp.cos(2 * np.pi * p["f"] * (mxr + pxr[:, None, None]) + np.pi / 2)
    fe = p["filter_scale"] * gauss * ce
    fo = p["filter_scale"] * gauss * co
    xe = jnp.einsum("bixy,nxy->bn", x, fe)
    xo = jnp.einsum("bixy,nxy->bn", x, fo)
    y = jnp.sqrt(jnp.square(xe) + jnp.square(xo))
    return p["final_scale"] * y + p["final_bias"]


if __name__ == "__main__":
    B, C, H, W, N = 2, 4, 16, 16, 8  # resolution=[16,16] -> HW=256 (lane-aligned)
    key = jax.random.PRNGKey(0)
    kx, kp = jax.random.split(key)
    x = jax.random.normal(kx, (B, C, H, W), jnp.float32)
    params = init_params(kp, N, resolution=(H, W))

    out = jax.block_until_ready(energy_model_forward(x, params))
    ref = jax.block_until_ready(reference_forward(x, params))

    assert out.shape == (B, N), out.shape
    np.testing.assert_allclose(np.asarray(out), np.asarray(ref), rtol=2e-3, atol=2e-3)
    print("KERNEL_OK")
</pallas_src>

<mosaic_0001>
module attributes {stable_mosaic.version = 11 : i64} {
  func.func @energy_kernel(%arg0: memref<8x256xf32, #tpu.memory_space<vmem>>, %arg1: memref<1x256xf32, #tpu.memory_space<vmem>>, %arg2: memref<1x256xf32, #tpu.memory_space<vmem>>, %arg3: memref<8x4xf32, #tpu.memory_space<vmem>>, %arg4: memref<2x8xf32, #tpu.memory_space<vmem>>, %arg5: memref<4xf32, #tpu.memory_space<smem>>, %arg6: memref<2x8xf32, #tpu.memory_space<vmem>>) attributes {dimension_semantics = [], scalar_prefetch = 0 : i64, scratch_operands = 0 : i64, tpu.core_type = #tpu.core_type<tc>} {
    %c0 = arith.constant 0 : index
    %0 = memref.load %arg5[%c0] : memref<4xf32, #tpu.memory_space<smem>>
    %c1 = arith.constant 1 : index
    %1 = memref.load %arg5[%c1] : memref<4xf32, #tpu.memory_space<smem>>
    %c2 = arith.constant 2 : index
    %2 = memref.load %arg5[%c2] : memref<4xf32, #tpu.memory_space<smem>>
    %c3 = arith.constant 3 : index
    %3 = memref.load %arg5[%c3] : memref<4xf32, #tpu.memory_space<smem>>
    %c0_0 = arith.constant 0 : index
    %c0_1 = arith.constant 0 : index
    %4 = vector.load %arg0[%c0_0, %c0_1] : memref<8x256xf32, #tpu.memory_space<vmem>>, vector<2x256xf32>
    %c2_2 = arith.constant 2 : index
    %c0_3 = arith.constant 0 : index
    %5 = vector.load %arg0[%c2_2, %c0_3] : memref<8x256xf32, #tpu.memory_space<vmem>>, vector<2x256xf32>
    %6 = arith.addf %4, %5 : vector<2x256xf32>
    %c4 = arith.constant 4 : index
    %c0_4 = arith.constant 0 : index
    %7 = vector.load %arg0[%c4, %c0_4] : memref<8x256xf32, #tpu.memory_space<vmem>>, vector<2x256xf32>
    %8 = arith.addf %6, %7 : vector<2x256xf32>
    %c6 = arith.constant 6 : index
    %c0_5 = arith.constant 0 : index
    %9 = vector.load %arg0[%c6, %c0_5] : memref<8x256xf32, #tpu.memory_space<vmem>>, vector<2x256xf32>
    %10 = arith.addf %8, %9 : vector<2x256xf32>
    %c0_6 = arith.constant 0 : index
    %c0_7 = arith.constant 0 : index
    %11 = vector.load %arg1[%c0_6, %c0_7] : memref<1x256xf32, #tpu.memory_space<vmem>>, vector<1x256xf32>
    %c0_8 = arith.constant 0 : index
    %c0_9 = arith.constant 0 : index
    %12 = vector.load %arg2[%c0_8, %c0_9] : memref<1x256xf32, #tpu.memory_space<vmem>>, vector<1x256xf32>
    %c0_10 = arith.constant 0 : index
    %c0_11 = arith.constant 0 : index
    %13 = vector.load %arg3[%c0_10, %c0_11] : memref<8x4xf32, #tpu.memory_space<vmem>>, vector<8x4xf32>
    %14 = vector.extract_strided_slice %13 {offsets = [0, 0], sizes = [8, 1], strides = [1, 1]} : vector<8x4xf32> to vector<8x1xf32>
    %15 = vector.extract_strided_slice %13 {offsets = [0, 1], sizes = [8, 1], strides = [1, 1]} : vector<8x4xf32> to vector<8x1xf32>
    %16 = vector.extract_strided_slice %13 {offsets = [0, 2], sizes = [8, 1], strides = [1, 1]} : vector<8x4xf32> to vector<8x1xf32>
    %17 = vector.extract_strided_slice %13 {offsets = [0, 3], sizes = [8, 1], strides = [1, 1]} : vector<8x4xf32> to vector<8x1xf32>
    %18 = vector.broadcast %11 : vector<1x256xf32> to vector<8x256xf32>
    %19 = vector.broadcast %14 : vector<8x1xf32> to vector<8x256xf32>
    %20 = arith.mulf %18, %19 : vector<8x256xf32>
    %21 = vector.broadcast %12 : vector<1x256xf32> to vector<8x256xf32>
    %22 = vector.broadcast %15 : vector<8x1xf32> to vector<8x256xf32>
    %23 = arith.mulf %21, %22 : vector<8x256xf32>
    %24 = arith.subf %20, %23 : vector<8x256xf32>
    %25 = vector.broadcast %11 : vector<1x256xf32> to vector<8x256xf32>
    %26 = vector.broadcast %15 : vector<8x1xf32> to vector<8x256xf32>
    %27 = arith.mulf %25, %26 : vector<8x256xf32>
    %28 = vector.broadcast %12 : vector<1x256xf32> to vector<8x256xf32>
    %29 = vector.broadcast %14 : vector<8x1xf32> to vector<8x256xf32>
    %30 = arith.mulf %28, %29 : vector<8x256xf32>
    %31 = arith.addf %27, %30 : vector<8x256xf32>
    %32 = vector.broadcast %16 : vector<8x1xf32> to vector<8x256xf32>
    %33 = arith.subf %24, %32 : vector<8x256xf32>
    %34 = vector.broadcast %17 : vector<8x1xf32> to vector<8x256xf32>
    %35 = arith.subf %31, %34 : vector<8x256xf32>
    %36 = arith.mulf %33, %33 : vector<8x256xf32>
    %37 = vector.broadcast %0 : f32 to vector<8x256xf32>
    %38 = arith.mulf %36, %37 : vector<8x256xf32>
    %39 = arith.mulf %35, %35 : vector<8x256xf32>
    %40 = vector.broadcast %1 : f32 to vector<8x256xf32>
    %41 = arith.mulf %39, %40 : vector<8x256xf32>
    %42 = arith.addf %38, %41 : vector<8x256xf32>
    %43 = math.exp %42 : vector<8x256xf32>
    %44 = vector.broadcast %16 : vector<8x1xf32> to vector<8x256xf32>
    %45 = arith.addf %24, %44 : vector<8x256xf32>
    %46 = vector.broadcast %2 : f32 to vector<8x256xf32>
    %47 = arith.mulf %46, %45 : vector<8x256xf32>
    %48 = math.cos %47 : vector<8x256xf32>
    %49 = arith.mulf %43, %48 : vector<8x256xf32>
    %50 = math.sin %47 : vector<8x256xf32>
    %51 = arith.mulf %43, %50 : vector<8x256xf32>
    %52 = tpu.concatenate %49, %51 in 0 : vector<8x256xf32>, vector<8x256xf32> -> vector<16x256xf32>
    %cst = arith.constant dense<0.000000e+00> : vector<2x16xf32>
    %53 = tpu.matmul %10, %52, %cst {dimension_numbers = #tpu.dot_dimension_numbers<[1], [1], [0], [0], [0, 0, 1, 0], [], []>} : vector<2x256xf32>, vector<16x256xf32>, vector<2x16xf32> -> vector<2x16xf32>
    %54 = vector.broadcast %3 : f32 to vector<2x16xf32>
    %55 = arith.mulf %53, %54 : vector<2x16xf32>
    %56 = vector.extract_strided_slice %55 {offsets = [0, 0], sizes = [2, 8], strides = [1, 1]} : vector<2x16xf32> to vector<2x8xf32>
    %57 = vector.extract_strided_slice %55 {offsets = [0, 8], sizes = [2, 8], strides = [1, 1]} : vector<2x16xf32> to vector<2x8xf32>
    %58 = arith.mulf %56, %56 : vector<2x8xf32>
    %59 = arith.mulf %57, %57 : vector<2x8xf32>
    %60 = arith.addf %58, %59 : vector<2x8xf32>
    %61 = math.sqrt %60 : vector<2x8xf32>
    %c0_12 = arith.constant 0 : index
    %c0_13 = arith.constant 0 : index
    %62 = vector.load %arg4[%c0_12, %c0_13] : memref<2x8xf32, #tpu.memory_space<vmem>>, vector<1x8xf32>
    %c1_14 = arith.constant 1 : index
    %c0_15 = arith.constant 0 : index
    %63 = vector.load %arg4[%c1_14, %c0_15] : memref<2x8xf32, #tpu.memory_space<vmem>>, vector<1x8xf32>
    %64 = vector.broadcast %62 : vector<1x8xf32> to vector<2x8xf32>
    %65 = arith.mulf %64, %61 : vector<2x8xf32>
    %66 = vector.broadcast %63 : vector<1x8xf32> to vector<2x8xf32>
    %67 = arith.addf %65, %66 : vector<2x8xf32>
    %c0_16 = arith.constant 0 : index
    %c0_17 = arith.constant 0 : index
    %68 = vector.load %arg6[%c0_16, %c0_17] : memref<2x8xf32, #tpu.memory_space<vmem>>, vector<2x8xf32>
    tpu.vector_store %arg6[%c0_16, %c0_17], %67 {strides = array<i32>} : memref<2x8xf32, #tpu.memory_space<vmem>>, vector<2x8xf32>,
    return
  }
}

</mosaic_0001>

<llo_original>
// kernel: tpu_custom_call.1
$region0: #{tpu_custom_call.1}
  #allocation0 [shape = 'u32[]', space=smem, size = 0x4, offset = 0x4, fixed_abs, tag = 'smem constant byte address 0x4 - core index']
  #allocation1 [shape = 'u32[144,128]{1,0:T(1,128)}', space=vmem, size = 0x12000, scoped, tag = 'internal scratch']
  %s0 = inlined_call_operand.hbm [shape: f32[8,256], index: 0, kind: input, shape index: {}]
  %s1 = inlined_call_operand.vmem [shape: f32[1,256], index: 1, kind: input, shape index: {}]
  %s2 = inlined_call_operand.vmem [shape: f32[1,256], index: 2, kind: input, shape index: {}]
  %s3 = inlined_call_operand.vmem [shape: f32[8,4], index: 3, kind: input, shape index: {}]
  %s4 = inlined_call_operand.vmem [shape: f32[2,8], index: 4, kind: input, shape index: {}]
  %s5 = inlined_call_operand.vmem [shape: f32[4], index: 5, kind: input, shape index: {}]
  %s6 = inlined_call_operand.hbm [shape: f32[2,8], index: 6, kind: output, shape index: {}]
  %s7 = sld [smem:[#allocation0]]
  $region42: #{tpu_custom_call.1} parent=0
    _
  %s9 = ssub.s32 1, %s7
  %s10 = scalar_select 0, %s9, %s7
  $region1: #{tpu_custom_call.1} parent=0
    #allocation2 [shape = 'u8[8192]{0}', space=vmem, size = 0x2000, scoped, tag = 'input window, operand 0, single buffered']
    #allocation3 [shape = 's32[1]{0}', space=sflag, size = 0x4, scoped, tag = 'scoped memory for tpu_custom_call.1']
    #allocation4 [shape = 's32[1]{0}', space=sflag, size = 0x4, scoped, tag = 'scoped memory for tpu_custom_call.1']
    #allocation5 [shape = 's32[1]{0}', space=sflag, size = 0x4, scoped, tag = 'scoped memory for tpu_custom_call.1']
    #allocation6 [shape = 'u8[512]{0}', space=smem, size = 0x200, scoped, tag = 'input window, operand 5, single buffered']
    #allocation7 [shape = 'u8[1024]{0}', space=vmem, size = 0x400, scoped, tag = 'output window, operand 0, single buffered']
    %11 = vsyncpa [#allocation3], 0
    %12 = vsyncpa [#allocation5], 0
    %13 = vsyncpa [#allocation4], 0
    // Predicated region
    $region2: #{tpu_custom_call.1} parent=1 // pred_check
      _
    $region3: #{tpu_custom_call.1} parent=1 // pred_check_branch
      %15 = sbr.rel (0) target = $region5
    $region4: #{tpu_custom_call.1} parent=1 // pred_region
      %s17 = ssub.s32 256, 256
      %18 = vsyncadd [#allocation3], %s17
      %s20 = sshll.u32 [#allocation2], 4
      %s21 = int_to_ptr.vmem [resolvable:$true] %s20
      %23 = dma.hbm_to_vmem [thread:$0]  %s0, 256, %s21, [#allocation3]
    $region5: #{tpu_custom_call.1} parent=1 // pred_fallthru
      _
    // Predicated region
    $region6: #{tpu_custom_call.1} parent=1 // pred_check
      _
    $region7: #{tpu_custom_call.1} parent=1 // pred_check_branch
      %25 = sbr.rel (0) target = $region9
    $region8: #{tpu_custom_call.1} parent=1 // pred_region
      _
    $region9: #{tpu_custom_call.1} parent=1 // pred_fallthru
      _
    // Predicated region
    $region10: #{tpu_custom_call.1} parent=1 // pred_check
      _
    $region11: #{tpu_custom_call.1} parent=1 // pred_check_branch
      %27 = sbr.rel (0) target = $region13
    $region12: #{tpu_custom_call.1} parent=1 // pred_region
      _
    $region13: #{tpu_custom_call.1} parent=1 // pred_fallthru
      _
    // Predicated region
    $region14: #{tpu_custom_call.1} parent=1 // pred_check
      _
    $region15: #{tpu_custom_call.1} parent=1 // pred_check_branch
      %29 = sbr.rel (0) target = $region17
    $region16: #{tpu_custom_call.1} parent=1 // pred_region
      _
    $region17: #{tpu_custom_call.1} parent=1 // pred_fallthru
      _
    // Predicated region
    $region18: #{tpu_custom_call.1} parent=1 // pred_check
      _
    $region19: #{tpu_custom_call.1} parent=1 // pred_check_branch
      %31 = sbr.rel (0) target = $region21
    $region20: #{tpu_custom_call.1} parent=1 // pred_region
      _
    $region21: #{tpu_custom_call.1} parent=1 // pred_fallthru
      _
    // Predicated region
    $region22: #{tpu_custom_call.1} parent=1 // pred_check
      _
    $region23: #{tpu_custom_call.1} parent=1 // pred_check_branch
      %33 = sbr.rel (0) target = $region25
    $region24: #{tpu_custom_call.1} parent=1 // pred_region
      %s35 = ssub.s32 16, 16
      %36 = vsyncadd [#allocation5], %s35
      %s38 = sshll.u32 %s5, 4
      %s39 = int_to_ptr.vmem [resolvable:$true] %s38
      %41 = dma.vmem_to_smem %s39, 16, [#allocation6], [#allocation5]
    $region25: #{tpu_custom_call.1} parent=1 // pred_fallthru
      _
    // Predicated region
    $region26: #{tpu_custom_call.1} parent=1 // pred_check
      _
    $region27: #{tpu_custom_call.1} parent=1 // pred_check_branch
      %43 = sbr.rel (0) target = $region29
    $region28: #{tpu_custom_call.1} parent=1 // pred_region
      %44 = dma.done [#allocation3], 256
    $region29: #{tpu_custom_call.1} parent=1 // pred_fallthru
      _
    // Predicated region
    $region30: #{tpu_custom_call.1} parent=1 // pred_check
      _
    $region31: #{tpu_custom_call.1} parent=1 // pred_check_branch
      %46 = sbr.rel (0) target = $region33
    $region32: #{tpu_custom_call.1} parent=1 // pred_region
      %47 = dma.done [#allocation5], 16
    $region33: #{tpu_custom_call.1} parent=1 // pred_fallthru
      _
    %48 = sfence
    %s49 = sld [smem:[#allocation6]]
    %s50 = sld [smem:[#allocation6 + $0x1]]
    %s51 = sld [smem:[#allocation6 + $0x2]]
    %s52 = sld [smem:[#allocation6 + $0x3]]
    %v53 = vld [vmem:[#allocation2] sm:$0x3]
    %v54 = vld [vmem:[#allocation2 + $0x8] sm:$0x3]
    %v55 = vld [vmem:[#allocation2] sm:$0xc]
    %v56 = vld [vmem:[#allocation2 + $0x8] sm:$0xc]
    %v59 = vrot.slane %v55, 2
    %v60 = vrot.slane %v56, 2
    %v63 = vadd.f32 %v53, %v59
    %v64 = vadd.f32 %v54, %v60
    %v65 = vld [vmem:[#allocation2] sm:$0x30]
    %v66 = vld [vmem:[#allocation2 + $0x8] sm:$0x30]
    %v69 = vrot.slane %v65, 4
    %v70 = vrot.slane %v66, 4
    %v73 = vadd.f32 %v63, %v69
    %v74 = vadd.f32 %v64, %v70
    %v75 = vld [vmem:[#allocation2] sm:$0xc0]
    %v76 = vld [vmem:[#allocation2 + $0x8] sm:$0xc0]
    %v79 = vrot.slane %v75, 6
    %v80 = vrot.slane %v76, 6
    %v83 = vadd.f32 %v73, %v79
    %v84 = vadd.f32 %v74, %v80
    %v85 = vld [vmem:[%s1] sm:$0x3]
    %v86 = vld [vmem:[%s2] sm:$0x3]
    %v87 = vld [vmem:[%s3] sm:$0xff]
    %v89 = vlaneseq
    %v90 = vshrl.u32 %v89, 7
    %v91 = vsub.s32 0, %v90
    %v92 = vrot.slane %v85, %v91
    %v93 = vlaneseq
    %v94 = vshrl.u32 %v93, 7
    %v95 = vsub.s32 1, %v94
    %v96 = vrot.slane %v85, %v95
    %100 = vset.pattern.permute.xlu0 0
    %101 = vperm.xlu0 %100, %v87
    %v102 = vpop.permute.xlu0 %101
    %v104 = vmul.f32 %v92, %v102
    %v105 = vmul.f32 %v96, %v102
    %v107 = vlaneseq
    %v108 = vshrl.u32 %v107, 7
    %v109 = vsub.s32 0, %v108
    %v110 = vrot.slane %v86, %v109
    %v111 = vlaneseq
    %v112 = vshrl.u32 %v111, 7
    %v113 = vsub.s32 1, %v112
    %v114 = vrot.slane %v86, %v113
    %117 = vset.pattern.permute.xlu0 1
    %118 = vperm.xlu0 %117, %v87
    %v119 = vpop.permute.xlu0 %118
    %v121 = vmul.f32 %v110, %v119
    %v122 = vmul.f32 %v114, %v119
    %v123 = vsub.f32 %v104, %v121
    %v124 = vsub.f32 %v105, %v122
    %v125 = vmul.f32 %v92, %v119
    %v126 = vmul.f32 %v96, %v119
    %v127 = vmul.f32 %v110, %v102
    %v128 = vmul.f32 %v114, %v102
    %v129 = vadd.f32 %v125, %v127
    %v130 = vadd.f32 %v126, %v128
    %131 = vset.pattern.permute.xlu0 2
    %132 = vperm.xlu0 %131, %v87
    %v133 = vpop.permute.xlu0 %132
    %v135 = vsub.f32 %v123, %v133
    %v136 = vsub.f32 %v124, %v133
    %137 = vset.pattern.permute.xlu0 3
    %138 = vperm.xlu0 %137, %v87
    %v139 = vpop.permute.xlu0 %138
    %v141 = vsub.f32 %v129, %v139
    %v142 = vsub.f32 %v130, %v139
    %v143 = vmul.f32 %v135, %v135
    %v144 = vmul.f32 %v136, %v136
    %v145 = vstv %s49
    %v146 = vmul.f32 %v143, %v145
    %v147 = vmul.f32 %v144, %v145
    %v148 = vmul.f32 %v141, %v141
    %v149 = vmul.f32 %v142, %v142
    %v150 = vstv %s50
    %v151 = vmul.f32 %v148, %v150
    %v152 = vmul.f32 %v149, %v150
    %v153 = vadd.f32 %v146, %v151
    %v154 = vadd.f32 %v147, %v152
    %v155 = vmul.f32 %v153, 1.442695
    %v156 = vpow.pop %v155
    %v157 = vmul.f32 %v154, 1.442695
    %v158 = vpow.pop %v157
    %v159 = vadd.f32 %v123, %v133
    %v160 = vadd.f32 %v124, %v133
    %v161 = vstv %s51
    %v162 = vmul.f32 %v161, %v159
    %v163 = vmul.f32 %v161, %v160
    %v164 = vand.u32 2147483647, %v162
    %vm165 = vcmp.le.f32.partialorder %v164, 0.7853982
    %vm166 = vcmp.lt.s32.totalorder %v162, 0
    %v167 = vand.u32 %v162, 2139095040
    %v168 = vshrl.u32 %v167, 23
    %v169 = vsub.s32 %v168, 127
    %v170 = vand.u32 2147483647, %v162
    %v171 = vand.u32 %v170, 8388607
    %v172 = vor.u32 %v171, 8388608
    %v173 = vsub.s32 0, %v172
    %v174 = vadd.s32 %v169, 1
    %vm175 = vcmp.gt.s32.totalorder %v174, 0
    %v176 = vsel %vm175, %v174, 0
    %v177 = vshrl.u32 %v176, 5
    %v178 = vand.u32 %v176, 31
    %v179 = vsub.s32 32, %v178
    %v180 = vshrl.u32 683565275, %v179
    %v181 = vshll.u32 683565275, %v178
    %v182 = vshrl.u32 2475754826, %v179
    %v183 = vor.u32 %v181, %v182
    %v184 = vshll.u32 2475754826, %v178
    %v185 = vshrl.u32 2131351028, %v179
    %v186 = vor.u32 %v184, %v185
    %v187 = vshll.u32 2131351028, %v178
    %v188 = vshrl.u32 2102212464, %v179
    %v189 = vor.u32 %v187, %v188
    %v190 = vshll.u32 2102212464, %v178
    %v191 = vshrl.u32 920167782, %v179
    %v192 = vor.u32 %v190, %v191
    %v193 = vshll.u32 920167782, %v178
    %v194 = vshrl.u32 1326507024, %v179
    %v195 = vor.u32 %v193, %v194
    %vm196 = vcmp.lt.s32.totalorder %v177, 1
    %vm197 = vcmp.lt.s32.totalorder %v177, 2
    %vm198 = vcmp.lt.s32.totalorder %v177, 3
    %vm199 = vcmp.lt.s32.totalorder %v177, 4
    %v200 = vsel %vm196, %v180, %v183
    %v201 = vsel %vm199, %v189, 2102212464
    %v202 = vsel %vm198, %v186, %v201
    %v203 = vsel %vm197, %v200, %v202
    %v204 = vsel %vm196, %v183, %v186
    %v205 = vsel %vm199, %v192, 920167782
    %v206 = vsel %vm198, %v189, %v205
    %v207 = vsel %vm197, %v204, %v206
    %v208 = vsel %vm196, %v186, %v189
    %v209 = vsel %vm199, %v195, 1326507024
    %v210 = vsel %vm198, %v192, %v209
    %v211 = vsel %vm197, %v208, %v210
    %v212 = vshll.u32 %v172, 8
    %v213 = vmul.u32.u64.compose %v212, %v211
    %v214 = vextract.low.u32 %v213
    %v215 = vextract.high.u32 %v213
    %v216 = vmul.u32.u64.compose %v212, %v207
    %v217 = vextract.low.u32 %v216
    %v218 = vextract.high.u32 %v216
    %v219 = vmul.u32 %v212, %v203
    %v220 = vadd.s32 %v215, %v217
    %vm221 = vc.u32 %v215, %v217
    %v222 = vadd.s32 %v218, 1
    %v223 = vsel %vm221, %v222, %v218
    %v224 = vadd.s32 %v219, %v223
    %v225 = vadd.s32 %v224, 536870912
    %v226 = vshrl.u32 %v225, 30
    %v227 = vshll.u32 %v226, 30
    %v228 = vsub.s32 %v224, %v227
    %vm229 = vcmp.lt.s32.totalorder %v228, 0
    %v230 = vsub.s32 0, %v228
    %v231 = vsel %vm229, %v230, %v228
    %v232 = vclz %v231
    %v233 = vsub.s32 %v232, 2
    %vm234 = vcmp.gt.s32.totalorder 0, %v233
    %v235 = vsel %vm234, 0, %v233
    %v236 = vsub.s32 32, %v235
    %v237 = vshll.u32 %v228, %v235
    %v238 = vshrl.u32 %v220, %v236
    %v239 = vor.u32 %v237, %v238
    %v240 = vsub.s32 4294967266, %v235
    %v241 = vadd.s32 %v240, 127
    %v242 = vshll.u32 %v241, 23
    %v243 = vor.u32 4788187, %v242
    %v244 = vand.u32 2147483647, %v243
    %v246 = vcvt.s32.f32 %v239
    %v247 = vmul.f32 %v246, %v244
    %v248 = vxor.u32 %v247, 2147483648
    %v249 = vsel %vm166, %v248, %v247
    %v250 = vsub.s32 4, %v226
    %v251 = vsel %vm166, %v250, %v226
    %v252 = vsel %vm165, %v162, %v249
    %v253 = vsel %vm165, 0, %v251
    %v254 = vcosq.f32.pop %v252
    %v255 = vsinq.f32.pop %v252
    %vm256 = vweird.f32 %v162
    %v257 = vand.u32 %v253, 3
    %vm258 = vcmp.lt.s32.totalorder %v257, 2
    %vm259 = vcmp.eq.s32.totalorder %v257, 0
    %v260 = vxor.u32 %v255, 2147483648
    %v261 = vsel %vm259, %v254, %v260
    %vm262 = vcmp.eq.s32.totalorder %v257, 2
    %v263 = vxor.u32 %v254, 2147483648
    %v264 = vsel %vm262, %v263, %v255
    %v265 = vsel %vm258, %v261, %v264
    %v266 = vsel %vm256, nan, %v265
    %v267 = vand.u32 2147483647, %v163
    %vm268 = vcmp.le.f32.partialorder %v267, 0.7853982
    %vm269 = vcmp.lt.s32.totalorder %v163, 0
    %v270 = vand.u32 %v163, 2139095040
    %v271 = vshrl.u32 %v270, 23
    %v272 = vsub.s32 %v271, 127
    %v273 = vand.u32 2147483647, %v163
    %v274 = vand.u32 %v273, 8388607
    %v275 = vor.u32 %v274, 8388608
    %v276 = vsub.s32 0, %v275
    %v277 = vadd.s32 %v272, 1
    %vm278 = vcmp.gt.s32.totalorder %v277, 0
    %v279 = vsel %vm278, %v277, 0
    %v280 = vshrl.u32 %v279, 5
    %v281 = vand.u32 %v279, 31
    %v282 = vsub.s32 32, %v281
    %v283 = vshrl.u32 683565275, %v282
    %v284 = vshll.u32 683565275, %v281
    %v285 = vshrl.u32 2475754826, %v282
    %v286 = vor.u32 %v284, %v285
    %v287 = vshll.u32 2475754826, %v281
    %v288 = vshrl.u32 2131351028, %v282
    %v289 = vor.u32 %v287, %v288
    %v290 = vshll.u32 2131351028, %v281
    %v291 = vshrl.u32 2102212464, %v282
    %v292 = vor.u32 %v290, %v291
    %v293 = vshll.u32 2102212464, %v281
    %v294 = vshrl.u32 920167782, %v282
    %v295 = vor.u32 %v293, %v294
    %v296 = vshll.u32 920167782, %v281
    %v297 = vshrl.u32 1326507024, %v282
    %v298 = vor.u32 %v296, %v297
    %vm299 = vcmp.lt.s32.totalorder %v280, 1
    %vm300 = vcmp.lt.s32.totalorder %v280, 2
    %vm301 = vcmp.lt.s32.totalorder %v280, 3
    %vm302 = vcmp.lt.s32.totalorder %v280, 4
    %v303 = vsel %vm299, %v283, %v286
    %v304 = vsel %vm302, %v292, 2102212464
    %v305 = vsel %vm301, %v289, %v304
    %v306 = vsel %vm300, %v303, %v305
    %v307 = vsel %vm299, %v286, %v289
    %v308 = vsel %vm302, %v295, 920167782
    %v309 = vsel %vm301, %v292, %v308
    %v310 = vsel %vm300, %v307, %v309
    %v311 = vsel %vm299, %v289, %v292
    %v312 = vsel %vm302, %v298, 1326507024
    %v313 = vsel %vm301, %v295, %v312
    %v314 = vsel %vm300, %v311, %v313
    %v315 = vshll.u32 %v275, 8
    %v316 = vmul.u32.u64.compose %v315, %v314
    %v317 = vextract.low.u32 %v316
    %v318 = vextract.high.u32 %v316
    %v319 = vmul.u32.u64.compose %v315, %v310
    %v320 = vextract.low.u32 %v319
    %v321 = vextract.high.u32 %v319
    %v322 = vmul.u32 %v315, %v306
    %v323 = vadd.s32 %v318, %v320
    %vm324 = vc.u32 %v318, %v320
    %v325 = vadd.s32 %v321, 1
    %v326 = vsel %vm324, %v325, %v321
    %v327 = vadd.s32 %v322, %v326
    %v328 = vadd.s32 %v327, 536870912
    %v329 = vshrl.u32 %v328, 30
    %v330 = vshll.u32 %v329, 30
    %v331 = vsub.s32 %v327, %v330
    %vm332 = vcmp.lt.s32.totalorder %v331, 0
    %v333 = vsub.s32 0, %v331
    %v334 = vsel %vm332, %v333, %v331
    %v335 = vclz %v334
    %v336 = vsub.s32 %v335, 2
    %vm337 = vcmp.gt.s32.totalorder 0, %v336
    %v338 = vsel %vm337, 0, %v336
    %v339 = vsub.s32 32, %v338
    %v340 = vshll.u32 %v331, %v338
    %v341 = vshrl.u32 %v323, %v339
    %v342 = vor.u32 %v340, %v341
    %v343 = vsub.s32 4294967266, %v338
    %v344 = vadd.s32 %v343, 127
    %v345 = vshll.u32 %v344, 23
    %v346 = vor.u32 4788187, %v345
    %v347 = vand.u32 2147483647, %v346
    %v349 = vcvt.s32.f32 %v342
    %v350 = vmul.f32 %v349, %v347
    %v351 = vxor.u32 %v350, 2147483648
    %v352 = vsel %vm269, %v351, %v350
    %v353 = vsub.s32 4, %v329
    %v354 = vsel %vm269, %v353, %v329
    %v355 = vsel %vm268, %v163, %v352
    %v356 = vsel %vm268, 0, %v354
    %v357 = vcosq.f32.pop %v355
    %v358 = vsinq.f32.pop %v355
    %vm359 = vweird.f32 %v163
    %v360 = vand.u32 %v356, 3
    %vm361 = vcmp.lt.s32.totalorder %v360, 2
    %vm362 = vcmp.eq.s32.totalorder %v360, 0
    %v363 = vxor.u32 %v358, 2147483648
    %v364 = vsel %vm362, %v357, %v363
    %vm365 = vcmp.eq.s32.totalorder %v360, 2
    %v366 = vxor.u32 %v357, 2147483648
    %v367 = vsel %vm365, %v366, %v358
    %v368 = vsel %vm361, %v364, %v367
    %v369 = vsel %vm359, nan, %v368
    %v370 = vmul.f32 %v156, %v266
    %v371 = vmul.f32 %v158, %v369
    %v372 = vand.u32 2147483647, %v162
    %vm373 = vcmp.le.f32.partialorder %v372, 0.7853982
    %vm374 = vcmp.lt.s32.totalorder %v162, 0
    %v375 = vand.u32 %v162, 2139095040
    %v376 = vshrl.u32 %v375, 23
    %v377 = vsub.s32 %v376, 127
    %v378 = vand.u32 2147483647, %v162
    %v379 = vand.u32 %v378, 8388607
    %v380 = vor.u32 %v379, 8388608
    %v381 = vsub.s32 0, %v380
    %v382 = vadd.s32 %v377, 1
    %vm383 = vcmp.gt.s32.totalorder %v382, 0
    %v384 = vsel %vm383, %v382, 0
    %v385 = vshrl.u32 %v384, 5
    %v386 = vand.u32 %v384, 31
    %v387 = vsub.s32 32, %v386
    %v388 = vshrl.u32 683565275, %v387
    %v389 = vshll.u32 683565275, %v386
    %v390 = vshrl.u32 2475754826, %v387
    %v391 = vor.u32 %v389, %v390
    %v392 = vshll.u32 2475754826, %v386
    %v393 = vshrl.u32 2131351028, %v387
    %v394 = vor.u32 %v392, %v393
    %v395 = vshll.u32 2131351028, %v386
    %v396 = vshrl.u32 2102212464, %v387
    %v397 = vor.u32 %v395, %v396
    %v398 = vshll.u32 2102212464, %v386
    %v399 = vshrl.u32 920167782, %v387
    %v400 = vor.u32 %v398, %v399
    %v401 = vshll.u32 920167782, %v386
    %v402 = vshrl.u32 1326507024, %v387
    %v403 = vor.u32 %v401, %v402
    %vm404 = vcmp.lt.s32.totalorder %v385, 1
    %vm405 = vcmp.lt.s32.totalorder %v385, 2
    %vm406 = vcmp.lt.s32.totalorder %v385, 3
    %vm407 = vcmp.lt.s32.totalorder %v385, 4
    %v408 = vsel %vm404, %v388, %v391
    %v409 = vsel %vm407, %v397, 2102212464
    %v410 = vsel %vm406, %v394, %v409
    %v411 = vsel %vm405, %v408, %v410
    %v412 = vsel %vm404, %v391, %v394
    %v413 = vsel %vm407, %v400, 920167782
    %v414 = vsel %vm406, %v397, %v413
    %v415 = vsel %vm405, %v412, %v414
    %v416 = vsel %vm404, %v394, %v397
    %v417 = vsel %vm407, %v403, 1326507024
    %v418 = vsel %vm406, %v400, %v417
    %v419 = vsel %vm405, %v416, %v418
    %v420 = vshll.u32 %v380, 8
    %v421 = vmul.u32.u64.compose %v420, %v419
    %v422 = vextract.low.u32 %v421
    %v423 = vextract.high.u32 %v421
    %v424 = vmul.u32.u64.compose %v420, %v415
    %v425 = vextract.low.u32 %v424
    %v426 = vextract.high.u32 %v424
    %v427 = vmul.u32 %v420, %v411
    %v428 = vadd.s32 %v423, %v425
    %vm429 = vc.u32 %v423, %v425
    %v430 = vadd.s32 %v426, 1
    %v431 = vsel %vm429, %v430, %v426
    %v432 = vadd.s32 %v427, %v431
    %v433 = vadd.s32 %v432, 536870912
    %v434 = vshrl.u32 %v433, 30
    %v435 = vshll.u32 %v434, 30
    %v436 = vsub.s32 %v432, %v435
    %vm437 = vcmp.lt.s32.totalorder %v436, 0
    %v438 = vsub.s32 0, %v436
    %v439 = vsel %vm437, %v438, %v436
    %v440 = vclz %v439
    %v441 = vsub.s32 %v440, 2
    %vm442 = vcmp.gt.s32.totalorder 0, %v441
    %v443 = vsel %vm442, 0, %v441
    %v444 = vsub.s32 32, %v443
    %v445 = vshll.u32 %v436, %v443
    %v446 = vshrl.u32 %v428, %v444
    %v447 = vor.u32 %v445, %v446
    %v448 = vsub.s32 4294967266, %v443
    %v449 = vadd.s32 %v448, 127
    %v450 = vshll.u32 %v449, 23
    %v451 = vor.u32 4788187, %v450
    %v452 = vand.u32 2147483647, %v451
    %v454 = vcvt.s32.f32 %v447
    %v455 = vmul.f32 %v454, %v452
    %v456 = vxor.u32 %v455, 2147483648
    %v457 = vsel %vm374, %v456, %v455
    %v458 = vsub.s32 4, %v434
    %v459 = vsel %vm374, %v458, %v434
    %v460 = vsel %vm373, %v162, %v457
    %v461 = vsel %vm373, 0, %v459
    %v462 = vcosq.f32.pop %v460
    %v463 = vsinq.f32.pop %v460
    %vm464 = vweird.f32 %v162
    %v465 = vadd.s32 %v461, 3
    %v466 = vand.u32 %v465, 3
    %vm467 = vcmp.lt.s32.totalorder %v466, 2
    %vm468 = vcmp.eq.s32.totalorder %v466, 0
    %v469 = vxor.u32 %v463, 2147483648
    %v470 = vsel %vm468, %v462, %v469
    %vm471 = vcmp.eq.s32.totalorder %v466, 2
    %v472 = vxor.u32 %v462, 2147483648
    %v473 = vsel %vm471, %v472, %v463
    %v474 = vsel %vm467, %v470, %v473
    %v475 = vsel %vm464, nan, %v474
    %v476 = vand.u32 2147483647, %v163
    %vm477 = vcmp.le.f32.partialorder %v476, 0.7853982
    %vm478 = vcmp.lt.s32.totalorder %v163, 0
    %v479 = vand.u32 %v163, 2139095040
    %v480 = vshrl.u32 %v479, 23
    %v481 = vsub.s32 %v480, 127
    %v482 = vand.u32 2147483647, %v163
    %v483 = vand.u32 %v482, 8388607
    %v484 = vor.u32 %v483, 8388608
    %v485 = vsub.s32 0, %v484
    %v486 = vadd.s32 %v481, 1
    %vm487 = vcmp.gt.s32.totalorder %v486, 0
    %v488 = vsel %vm487, %v486, 0
    %v489 = vshrl.u32 %v488, 5
    %v490 = vand.u32 %v488, 31
    %v491 = vsub.s32 32, %v490
    %v492 = vshrl.u32 683565275, %v491
    %v493 = vshll.u32 683565275, %v490
    %v494 = vshrl.u32 2475754826, %v491
    %v495 = vor.u32 %v493, %v494
    %v496 = vshll.u32 2475754826, %v490
    %v497 = vshrl.u32 2131351028, %v491
    %v498 = vor.u32 %v496, %v497
    %v499 = vshll.u32 2131351028, %v490
    %v500 = vshrl.u32 2102212464, %v491
    %v501 = vor.u32 %v499, %v500
    %v502 = vshll.u32 2102212464, %v490
    %v503 = vshrl.u32 920167782, %v491
    %v504 = vor.u32 %v502, %v503
    %v505 = vshll.u32 920167782, %v490
    %v506 = vshrl.u32 1326507024, %v491
    %v507 = vor.u32 %v505, %v506
    %vm508 = vcmp.lt.s32.totalorder %v489, 1
    %vm509 = vcmp.lt.s32.totalorder %v489, 2
    %vm510 = vcmp.lt.s32.totalorder %v489, 3
    %vm511 = vcmp.lt.s32.totalorder %v489, 4
    %v512 = vsel %vm508, %v492, %v495
    %v513 = vsel %vm511, %v501, 2102212464
    %v514 = vsel %vm510, %v498, %v513
    %v515 = vsel %vm509, %v512, %v514
    %v516 = vsel %vm508, %v495, %v498
    %v517 = vsel %vm511, %v504, 920167782
    %v518 = vsel %vm510, %v501, %v517
    %v519 = vsel %vm509, %v516, %v518
    %v520 = vsel %vm508, %v498, %v501
    %v521 = vsel %vm511, %v507, 1326507024
    %v522 = vsel %vm510, %v504, %v521
    %v523 = vsel %vm509, %v520, %v522
    %v524 = vshll.u32 %v484, 8
    %v525 = vmul.u32.u64.compose %v524, %v523
    %v526 = vextract.low.u32 %v525
    %v527 = vextract.high.u32 %v525
    %v528 = vmul.u32.u64.compose %v524, %v519
    %v529 = vextract.low.u32 %v528
    %v530 = vextract.high.u32 %v528
    %v531 = vmul.u32 %v524, %v515
    %v532 = vadd.s32 %v527, %v529
    %vm533 = vc.u32 %v527, %v529
    %v534 = vadd.s32 %v530, 1
    %v535 = vsel %vm533, %v534, %v530
    %v536 = vadd.s32 %v531, %v535
    %v537 = vadd.s32 %v536, 536870912
    %v538 = vshrl.u32 %v537, 30
    %v539 = vshll.u32 %v538, 30
    %v540 = vsub.s32 %v536, %v539
    %vm541 = vcmp.lt.s32.totalorder %v540, 0
    %v542 = vsub.s32 0, %v540
    %v543 = vsel %vm541, %v542, %v540
    %v544 = vclz %v543
    %v545 = vsub.s32 %v544, 2
    %vm546 = vcmp.gt.s32.totalorder 0, %v545
    %v547 = vsel %vm546, 0, %v545
    %v548 = vsub.s32 32, %v547
    %v549 = vshll.u32 %v540, %v547
    %v550 = vshrl.u32 %v532, %v548
    %v551 = vor.u32 %v549, %v550
    %v552 = vsub.s32 4294967266, %v547
    %v553 = vadd.s32 %v552, 127
    %v554 = vshll.u32 %v553, 23
    %v555 = vor.u32 4788187, %v554
    %v556 = vand.u32 2147483647, %v555
    %v558 = vcvt.s32.f32 %v551
    %v559 = vmul.f32 %v558, %v556
    %v560 = vxor.u32 %v559, 2147483648
    %v561 = vsel %vm478, %v560, %v559
    %v562 = vsub.s32 4, %v538
    %v563 = vsel %vm478, %v562, %v538
    %v564 = vsel %vm477, %v163, %v561
    %v565 = vsel %vm477, 0, %v563
    %v566 = vcosq.f32.pop %v564
    %v567 = vsinq.f32.pop %v564
    %vm568 = vweird.f32 %v163
    %v569 = vadd.s32 %v565, 3
    %v570 = vand.u32 %v569, 3
    %vm571 = vcmp.lt.s32.totalorder %v570, 2
    %vm572 = vcmp.eq.s32.totalorder %v570, 0
    %v573 = vxor.u32 %v567, 2147483648
    %v574 = vsel %vm572, %v566, %v573
    %vm575 = vcmp.eq.s32.totalorder %v570, 2
    %v576 = vxor.u32 %v566, 2147483648
    %v577 = vsel %vm575, %v576, %v567
    %v578 = vsel %vm571, %v574, %v577
    %v579 = vsel %vm568, nan, %v578
    %v580 = vmul.f32 %v156, %v475
    %v581 = vmul.f32 %v158, %v579
    %582 = vmatprep.subr.mxu0 0.0
    %583 = vmatpush1.xpose.msra.mxu0 0.0
    %584 = vmatprep.subr.mxu0 0.0
    %585 = vmatpush1.xpose.msra.mxu0 0.0
    %586 = vmatprep.subr.mxu0 0.0
    %587 = vmatpush1.xpose.msra.mxu0 0.0
    %588 = vmatprep.subr.mxu0 0.0
    %589 = vmatpush1.xpose.msra.mxu0 0.0
    %590 = vmatprep.subr.mxu0 0.0
    %591 = vmatpush1.xpose.msra.mxu0 0.0
    %592 = vmatprep.subr.mxu0 0.0
    %593 = vmatpush1.xpose.msra.mxu0 0.0
    %594 = vmatprep.subr.mxu0 0.0
    %595 = vmatpush1.xpose.msra.mxu0 0.0
    %596 = vmatprep.subr.mxu0 0.0
    %597 = vmatpush1.xpose.msra.mxu0 0.0
    %598 = vmatprep.subr.mxu0 0.0
    %599 = vmatpush1.xpose.msra.mxu0 0.0
    %600 = vmatprep.subr.mxu0 0.0
    %601 = vmatpush1.xpose.msra.mxu0 0.0
    %602 = vmatprep.subr.mxu0 0.0
    %603 = vmatpush1.xpose.msra.mxu0 0.0
    %604 = vmatprep.subr.mxu0 0.0
    %605 = vmatpush1.xpose.msra.mxu0 0.0
    %606 = vmatprep.subr.mxu0 0.0
    %607 = vmatpush1.xpose.msra.mxu0 0.0
    %608 = vmatprep.subr.mxu0 0.0
    %609 = vmatpush1.xpose.msra.mxu0 0.0
    %610 = vmatprep.subr.mxu0 %v581
    %611 = vmatpush1.xpose.msra.mxu0 %v580
    %612 = vmatprep.subr.mxu0 %v371
    %613 = vmatpush1.xpose.msra.mxu0 %v370
    %614 = vmatprep.subr.mxu0 0.0
    %615 = vmatpush2.xpose.msra.mxu0 0.0
    %616 = vmatprep.subr.mxu0 0.0
    %617 = vmatpush2.xpose.msra.mxu0 0.0
    %618 = vmatprep.subr.mxu0 0.0
    %619 = vmatpush2.xpose.msra.mxu0 0.0
    %620 = vmatprep.subr.mxu0 0.0
    %621 = vmatpush2.xpose.msra.mxu0 0.0
    %622 = vmatprep.subr.mxu0 0.0
    %623 = vmatpush2.xpose.msra.mxu0 0.0
    %624 = vmatprep.subr.mxu0 0.0
    %625 = vmatpush2.xpose.msra.mxu0 0.0
    %626 = vmatprep.subr.mxu0 0.0
    %627 = vmatpush2.xpose.msra.mxu0 0.0
    %628 = vmatprep.subr.mxu0 0.0
    %629 = vmatpush2.xpose.msra.mxu0 0.0
    %630 = vmatprep.subr.mxu0 0.0
    %631 = vmatpush2.xpose.msra.mxu0 0.0
    %632 = vmatprep.subr.mxu0 0.0
    %633 = vmatpush2.xpose.msra.mxu0 0.0
    %634 = vmatprep.subr.mxu0 0.0
    %635 = vmatpush2.xpose.msra.mxu0 0.0
    %636 = vmatprep.subr.mxu0 0.0
    %637 = vmatpush2.xpose.msra.mxu0 0.0
    %638 = vmatprep.subr.mxu0 0.0
    %639 = vmatpush2.xpose.msra.mxu0 0.0
    %640 = vmatprep.subr.mxu0 0.0
    %641 = vmatpush2.xpose.msra.mxu0 0.0
    %642 = vmatprep.subr.mxu0 0.0
    %643 = vmatpush2.xpose.msra.mxu0 0.0
    %644 = vmatprep.subr.mxu0 0.0
    %645 = vmatpush2.xpose.msra.mxu0 0.0
    %646 = vmatprep.mubr.f32.mxu0 %v84
    %647 = vmatmul.mubr.f32.gmra.mxu0 %v83
    %v648 = vpop.f32.mrf.mxu0
    %v649 = vadd.f32 0.0, %v648
    %v650 = vpop.f32.mrf.mxu0
    %651 = vdwg.mxu0
    %v652 = vstv %s52
    %v653 = vmul.f32 %v649, %v652
    %v654 = vmul.f32 %v653, %v653
    %656 = vrot.lane.b32.xlu0 %v654, 120
    %v657 = vpop.permute.xlu0 %656
    %v659 = vadd.f32 %v654, %v657
    %v660 = vrsqrt.pop %v659
    %v661 = vmul.f32 %v659, %v660
    %vm662 = vcmp.eq.f32.partialorder %v659, inf
    %v663 = vsel %vm662, %v659, %v661
    %vm664 = vcmp.eq.f32.partialorder %v659, 0.0
    %v665 = vand.u32 %v659, 2147483648
    %v666 = vsel %vm664, %v665, %v663
    %v667 = vld [vmem:[%s4] sm:$0x1]
    %v668 = vld [vmem:[%s4 + $0x1] sm:$0x1]
    %v669 = vlaneseq
    %v670 = vshrl.u32 %v669, 7
    %v671 = vsub.s32 0, %v670
    %v672 = vrot.slane %v667, %v671
    %v673 = vmul.f32 %v672, %v666
    %v674 = vlaneseq
    %v675 = vshrl.u32 %v674, 7
    %v676 = vsub.s32 0, %v675
    %v677 = vrot.slane %v668, %v676
    %v678 = vadd.f32 %v673, %v677
    %vm679 = vcmask 58368
    %680 = vst.msk [vmem:[#allocation7] sm:$0x3] %vm679, %v678
    // Predicated region
    $region34: #{tpu_custom_call.1} parent=1 // pred_check
      _
    $region35: #{tpu_custom_call.1} parent=1 // pred_check_branch
      %682 = sbr.rel (0) target = $region37
    $region36: #{tpu_custom_call.1} parent=1 // pred_region
      %s684 = ssub.s32 32, 32
      %685 = vsyncadd [#allocation4], %s684
      %s687 = sshll.u32 [#allocation7], 4
      %s688 = int_to_ptr.vmem [resolvable:$true] %s687
      %690 = dma.vmem_to_hbm [thread:$0]  %s688, 32, %s6, [#allocation4]
    $region37: #{tpu_custom_call.1} parent=1 // pred_fallthru
      _
    // Predicated region
    $region38: #{tpu_custom_call.1} parent=1 // pred_check
      _
    $region39: #{tpu_custom_call.1} parent=1 // pred_check_branch
      %692 = sbr.rel (0) target = $region41
    $region40: #{tpu_custom_call.1} parent=1 // pred_region
      %693 = dma.done [#allocation4], 32
    $region41: #{tpu_custom_call.1} parent=1 // pred_fallthru
      _
    %694 = vsyncpa [#allocation3], 1
    %695 = vsyncpa [#allocation4], 1
    %696 = vsyncpa [#allocation5], 1

</llo_original>
